<compile_context>
chip_gen: v7x
topology: tpu7x:2x2x1
jax: 0.10.0
libtpu: 0.0.40
codegen_flags: <defaults>
</compile_context>

<pallas_src>
import jax
import jax.numpy as jnp
from jax.experimental import pallas as pl
from jax.experimental.pallas import tpu as pltpu


# ----------------------------------------------------------------------------
# Kernel: one node-tile per grid step.
# ----------------------------------------------------------------------------
def _score_jk_kernel(src_ref, w1_ref, bw_ref, b2_ref, out_ref):
    L, tn, D = src_ref.shape

    src = src_ref[...].astype(jnp.float32)    # (L, tn, D)
    src2d = src.reshape(L * tn, D)            # leading-dim merge (layout-preserving)

    bw = bw_ref[...]                          # (2, D): row0 = b1, row1 = w2
    b1 = bw[0:1, :]                           # (1, D)
    w2_row = bw[1:2, :]                       # (1, D)
    b2 = b2_ref[...]                          # (1, 1)

    # ---- fused first Linear over all L layers + ReLU (MXU + VPU) -----------
    h = jnp.dot(src2d, w1_ref[...], preferred_element_type=jnp.float32) + b1
    h = jnp.maximum(h, 0.0)                   # (L*tn, D)

    # ---- second Linear (D -> 1) as a lane reduction (VPU mul + XLU reduce) --
    s = jnp.sum(h * w2_row, axis=-1, keepdims=True) + b2      # (L*tn, 1)

    # ---- softmax over the L layers (unrolled; L is small & static) ----------
    s_l = [s[l * tn:(l + 1) * tn, :] for l in range(L)]       # each (tn, 1)
    m = s_l[0]
    for l in range(1, L):
        m = jnp.maximum(m, s_l[l])
    e_l = [jnp.exp(s_l[l] - m) for l in range(L)]              # EUP
    denom = e_l[0]
    for l in range(1, L):
        denom = denom + e_l[l]
    inv = pl.reciprocal(denom)                # exact 1/x, (tn, 1)

    # ---- attention-weighted sum over layers, normalize once at the end -----
    acc = e_l[0] * src2d[0:tn, :]
    for l in range(1, L):
        acc = acc + e_l[l] * src2d[l * tn:(l + 1) * tn, :]
    out_ref[...] = (acc * inv).astype(out_ref.dtype)


# ----------------------------------------------------------------------------
# Wrapper
# ----------------------------------------------------------------------------
def score_jk_forward(params, src, *, tile_n=None):
    """src: (L, N, D) stacked per-layer node features (layer-major)."""
    L, N, D = src.shape

    if tile_n is None:
        # Biggest tile that keeps VMEM modest while amortizing per-step
        # overhead; small inputs get a single grid step.
        tile_n = N if N <= 256 else 256
    tile_n = max(8, min(tile_n, max(N, 8)))

    # Pad the node dimension to a multiple of the tile (softmax/weights are
    # per-node, so padded rows never contaminate real rows).
    n_pad = (-N) % tile_n
    if n_pad:
        src = jnp.pad(src, ((0, 0), (0, n_pad), (0, 0)))
    n_total = N + n_pad
    assert n_total % tile_n == 0

    # Pack the two tiny (D,) params into one (2, D) lane-dense input.
    bw = jnp.concatenate(
        [params["b1"].reshape(1, D).astype(jnp.float32),
         params["w2"].reshape(1, D).astype(jnp.float32)], axis=0)
    b2 = params["b2"].reshape(1, 1).astype(jnp.float32)

    grid = (n_total // tile_n,)
    out = pl.pallas_call(
        _score_jk_kernel,
        out_shape=jax.ShapeDtypeStruct((n_total, D), src.dtype),
        grid_spec=pltpu.PrefetchScalarGridSpec(
            num_scalar_prefetch=0,
            grid=grid,
            in_specs=[
                pl.BlockSpec((L, tile_n, D), lambda i: (0, i, 0)),   # node tile
                pl.BlockSpec((D, D), lambda i: (0, 0)),              # w1 (resident)
                pl.BlockSpec((2, D), lambda i: (0, 0)),              # [b1; w2]
                pl.BlockSpec((1, 1), lambda i: (0, 0)),              # b2
            ],
            out_specs=pl.BlockSpec((tile_n, D), lambda i: (i, 0)),
        ),
        compiler_params=pltpu.CompilerParams(
            dimension_semantics=("parallel",)),
    )(src, params["w1"].astype(jnp.float32), bw, b2)

    if n_pad:
        out = out[:N]
    return out


# ----------------------------------------------------------------------------
# Parameter init (matches ScoreJK.reset_parameters: xavier weights, zero bias)
# ----------------------------------------------------------------------------
def init_params(key, in_dim):
    k1, k2 = jax.random.split(key, 2)
    bnd1 = (6.0 / (in_dim + in_dim)) ** 0.5       # Linear(D, D)
    bnd2 = (6.0 / (in_dim + 1)) ** 0.5            # Linear(D, 1)
    return dict(
        w1=jax.random.uniform(k1, (in_dim, in_dim), jnp.float32, -bnd1, bnd1),
        b1=jnp.zeros((in_dim,), jnp.float32),
        w2=jax.random.uniform(k2, (in_dim,), jnp.float32, -bnd2, bnd2),
        b2=jnp.zeros((), jnp.float32),
    )


# ----------------------------------------------------------------------------
# Pure-JAX reference (mirrors the PyTorch forward)
# ----------------------------------------------------------------------------
def reference_forward(params, src):
    hi = jax.lax.Precision.HIGHEST
    x = jnp.transpose(src, (1, 0, 2))                       # torch.stack(src, dim=1): (N, L, D)
    h = jnp.maximum(
        jnp.einsum("nld,de->nle", x, params["w1"], precision=hi) + params["b1"], 0.0)
    a = jnp.einsum("nld,d->nl", h, params["w2"], precision=hi) + params["b2"]
    a = jax.nn.softmax(a, axis=1)[..., None]                # (N, L, 1)
    return jnp.sum(a * x, axis=1)                           # (N, D)


if __name__ == "__main__":
    # Small, lane-dense shapes: L=4 JK layers, N=64 nodes, in_dim D=128.
    L, N, D = 4, 64, 128
    TILE_N = 32                                             # grid = (2,), exercises the parallel axis

    key = jax.random.PRNGKey(0)
    k_p, k_src, k_b1, k_b2 = jax.random.split(key, 4)

    params = init_params(k_p, in_dim=D)
    # reset_parameters zeroes biases; give them small nonzero values here so
    # the bias paths are actually exercised by the numerical check.
    params["b1"] = 0.05 * jax.random.normal(k_b1, (D,), jnp.float32)
    params["b2"] = 0.05 * jax.random.normal(k_b2, (), jnp.float32)

    src = jax.random.normal(k_src, (L, N, D), jnp.float32)  # stacked per-layer features

    out = score_jk_forward(params, src, tile_n=TILE_N)
    jax.block_until_ready(out)

    ref = reference_forward(params, src)
    assert out.shape == (N, D), out.shape
    assert jnp.allclose(out, ref, rtol=2e-3, atol=2e-3), float(jnp.max(jnp.abs(out - ref)))

    print("KERNEL_OK")
</pallas_src>

<mosaic_0001>
module attributes {stable_mosaic.version = 11 : i64} {
  func.func @_score_jk_kernel(%arg0: i32, %arg1: memref<4x32x128xf32, #tpu.memory_space<vmem>>, %arg2: memref<128x128xf32, #tpu.memory_space<vmem>>, %arg3: memref<2x128xf32, #tpu.memory_space<vmem>>, %arg4: memref<1x1xf32, #tpu.memory_space<vmem>>, %arg5: memref<32x128xf32, #tpu.memory_space<vmem>>) attributes {dimension_semantics = [#tpu.dimension_semantics<parallel>], iteration_bounds = array<i64: 2>, scalar_prefetch = 0 : i64, scratch_operands = 0 : i64, tpu.core_type = #tpu.core_type<tc>, window_params = [{transform_indices = @transform_0, window_bounds = array<i64: 4, 32, 128>}, {pipeline_mode = #tpu.pipeline_mode<synchronous>, transform_indices = @transform_1, window_bounds = array<i64: 128, 128>}, {pipeline_mode = #tpu.pipeline_mode<synchronous>, transform_indices = @transform_2, window_bounds = array<i64: 2, 128>}, {pipeline_mode = #tpu.pipeline_mode<synchronous>, transform_indices = @transform_3, window_bounds = array<i64: 1, 1>}, {transform_indices = @transform_4, window_bounds = array<i64: 32, 128>}]} {
    %c0 = arith.constant 0 : index
    %c0_0 = arith.constant 0 : index
    %c0_1 = arith.constant 0 : index
    %0 = vector.load %arg1[%c0, %c0_0, %c0_1] : memref<4x32x128xf32, #tpu.memory_space<vmem>>, vector<4x32x128xf32>
    %1 = vector.shape_cast %0 : vector<4x32x128xf32> to vector<128x128xf32>
    %c0_2 = arith.constant 0 : index
    %c0_3 = arith.constant 0 : index
    %2 = vector.load %arg3[%c0_2, %c0_3] : memref<2x128xf32, #tpu.memory_space<vmem>>, vector<2x128xf32>
    %3 = vector.extract_strided_slice %2 {offsets = [0, 0], sizes = [1, 128], strides = [1, 1]} : vector<2x128xf32> to vector<1x128xf32>
    %4 = vector.extract_strided_slice %2 {offsets = [1, 0], sizes = [1, 128], strides = [1, 1]} : vector<2x128xf32> to vector<1x128xf32>
    %c0_4 = arith.constant 0 : index
    %c0_5 = arith.constant 0 : index
    %5 = vector.load %arg4[%c0_4, %c0_5] : memref<1x1xf32, #tpu.memory_space<vmem>>, vector<1x1xf32>
    %c0_6 = arith.constant 0 : index
    %c0_7 = arith.constant 0 : index
    %6 = vector.load %arg2[%c0_6, %c0_7] : memref<128x128xf32, #tpu.memory_space<vmem>>, vector<128x128xf32>
    %cst = arith.constant dense<0.000000e+00> : vector<128x128xf32>
    %7 = tpu.matmul %1, %6, %cst {dimension_numbers = #tpu.dot_dimension_numbers<[1], [0], [0], [1], [0, 0, 1, 1], [], []>} : vector<128x128xf32>, vector<128x128xf32>, vector<128x128xf32> -> vector<128x128xf32>
    %8 = vector.broadcast %3 : vector<1x128xf32> to vector<128x128xf32>
    %9 = arith.addf %7, %8 : vector<128x128xf32>
    %cst_8 = arith.constant 0.000000e+00 : f32
    %10 = vector.broadcast %cst_8 : f32 to vector<128x128xf32>
    %11 = arith.maximumf %9, %10 : vector<128x128xf32>
    %12 = vector.broadcast %4 : vector<1x128xf32> to vector<128x128xf32>
    %13 = arith.mulf %11, %12 : vector<128x128xf32>
    %cst_9 = arith.constant dense<0.000000e+00> : vector<128xf32>
    %14 = vector.multi_reduction <add>, %13, %cst_9 [1] : vector<128x128xf32> to vector<128xf32>
    %15 = vector.shape_cast %14 : vector<128xf32> to vector<128x1xf32>
    %16 = vector.broadcast %5 : vector<1x1xf32> to vector<128x1xf32>
    %17 = arith.addf %15, %16 : vector<128x1xf32>
    %18 = vector.extract_strided_slice %17 {offsets = [0, 0], sizes = [32, 1], strides = [1, 1]} : vector<128x1xf32> to vector<32x1xf32>
    %19 = vector.extract_strided_slice %17 {offsets = [32, 0], sizes = [32, 1], strides = [1, 1]} : vector<128x1xf32> to vector<32x1xf32>
    %20 = vector.extract_strided_slice %17 {offsets = [64, 0], sizes = [32, 1], strides = [1, 1]} : vector<128x1xf32> to vector<32x1xf32>
    %21 = vector.extract_strided_slice %17 {offsets = [96, 0], sizes = [32, 1], strides = [1, 1]} : vector<128x1xf32> to vector<32x1xf32>
    %22 = arith.maximumf %18, %19 : vector<32x1xf32>
    %23 = arith.maximumf %22, %20 : vector<32x1xf32>
    %24 = arith.maximumf %23, %21 : vector<32x1xf32>
    %25 = arith.subf %18, %24 : vector<32x1xf32>
    %26 = math.exp %25 : vector<32x1xf32>
    %27 = arith.subf %19, %24 : vector<32x1xf32>
    %28 = math.exp %27 : vector<32x1xf32>
    %29 = arith.subf %20, %24 : vector<32x1xf32>
    %30 = math.exp %29 : vector<32x1xf32>
    %31 = arith.subf %21, %24 : vector<32x1xf32>
    %32 = math.exp %31 : vector<32x1xf32>
    %33 = arith.addf %26, %28 : vector<32x1xf32>
    %34 = arith.addf %33, %30 : vector<32x1xf32>
    %35 = arith.addf %34, %32 : vector<32x1xf32>
    %36 = tpu.reciprocal %35 : vector<32x1xf32> -> vector<32x1xf32>
    %37 = vector.extract_strided_slice %1 {offsets = [0, 0], sizes = [32, 128], strides = [1, 1]} : vector<128x128xf32> to vector<32x128xf32>
    %38 = vector.broadcast %26 : vector<32x1xf32> to vector<32x128xf32>
    %39 = arith.mulf %38, %37 : vector<32x128xf32>
    %40 = vector.extract_strided_slice %1 {offsets = [32, 0], sizes = [32, 128], strides = [1, 1]} : vector<128x128xf32> to vector<32x128xf32>
    %41 = vector.broadcast %28 : vector<32x1xf32> to vector<32x128xf32>
    %42 = arith.mulf %41, %40 : vector<32x128xf32>
    %43 = arith.addf %39, %42 : vector<32x128xf32>
    %44 = vector.extract_strided_slice %1 {offsets = [64, 0], sizes = [32, 128], strides = [1, 1]} : vector<128x128xf32> to vector<32x128xf32>
    %45 = vector.broadcast %30 : vector<32x1xf32> to vector<32x128xf32>
    %46 = arith.mulf %45, %44 : vector<32x128xf32>
    %47 = arith.addf %43, %46 : vector<32x128xf32>
    %48 = vector.extract_strided_slice %1 {offsets = [96, 0], sizes = [32, 128], strides = [1, 1]} : vector<128x128xf32> to vector<32x128xf32>
    %49 = vector.broadcast %32 : vector<32x1xf32> to vector<32x128xf32>
    %50 = arith.mulf %49, %48 : vector<32x128xf32>
    %51 = arith.addf %47, %50 : vector<32x128xf32>
    %52 = vector.broadcast %36 : vector<32x1xf32> to vector<32x128xf32>
    %53 = arith.mulf %51, %52 : vector<32x128xf32>
    %c0_10 = arith.constant 0 : index
    %c0_11 = arith.constant 0 : index
    %54 = vector.load %arg5[%c0_10, %c0_11] : memref<32x128xf32, #tpu.memory_space<vmem>>, vector<32x128xf32>
    tpu.vector_store %arg5[%c0_10, %c0_11], %53 {strides = array<i32>} : memref<32x128xf32, #tpu.memory_space<vmem>>, vector<32x128xf32>,
    return
  }
  func.func @transform_0(%arg0: i32) -> (i32, i32, i32) {
    %c0_i32 = arith.constant 0 : i32
    %c0_i32_0 = arith.constant 0 : i32
    %c0_i32_1 = arith.constant 0 : i32
    return %c0_i32, %arg0, %c0_i32_0 : i32, i32, i32
  }
  func.func @transform_1(%arg0: i32) -> (i32, i32) {
    %c0_i32 = arith.constant 0 : i32
    %c0_i32_0 = arith.constant 0 : i32
    %c0_i32_1 = arith.constant 0 : i32
    return %c0_i32, %c0_i32_0 : i32, i32
  }
  func.func @transform_2(%arg0: i32) -> (i32, i32) {
    %c0_i32 = arith.constant 0 : i32
    %c0_i32_0 = arith.constant 0 : i32
    %c0_i32_1 = arith.constant 0 : i32
    return %c0_i32, %c0_i32_0 : i32, i32
  }
  func.func @transform_3(%arg0: i32) -> (i32, i32) {
    %c0_i32 = arith.constant 0 : i32
    %c0_i32_0 = arith.constant 0 : i32
    %c0_i32_1 = arith.constant 0 : i32
    return %c0_i32, %c0_i32_0 : i32, i32
  }
  func.func @transform_4(%arg0: i32) -> (i32, i32) {
    %c0_i32 = arith.constant 0 : i32
    %c0_i32_0 = arith.constant 0 : i32
    return %arg0, %c0_i32 : i32, i32
  }
}

</mosaic_0001>

<llo_original>
// kernel: tpu_custom_call.1
$region0: #{tpu_custom_call.1}
  #allocation0 [shape = 'u32[]', space=smem, size = 0x4, offset = 0x4, fixed_abs, tag = 'smem constant byte address 0x4 - core index']
  #allocation1 [shape = 'u32[144,128]{1,0:T(1,128)}', space=vmem, size = 0x12000, scoped, tag = 'internal scratch']
  #allocation2 [shape = 'f32[1,1]{1,0:T(1,128)S(1)}', space=vmem, size = 0x200, scoped, tag = 'scoped memory for tpu_custom_call.1']
  #allocation9 [shape = 's32[]', space=sflag, size = 0x4, offset = 0, fixed_abs, tag = 'sflag constant byte address 0x0 - dummy sync flag']
  %s0 = inlined_call_operand.hbm [shape: f32[4,64,128], index: 0, kind: input, shape index: {}]
  %s1 = inlined_call_operand.hbm [shape: f32[128,128], index: 1, kind: input, shape index: {}]
  %s2 = inlined_call_operand.vmem [shape: f32[2,128], index: 2, kind: input, shape index: {}]
  %s3 = inlined_call_operand.<no memory space> [shape: f32[1,1], index: 3, kind: input, shape index: {}]
  %s4 = inlined_call_operand.hbm [shape: f32[64,128], index: 4, kind: output, shape index: {}]
  %s5 = sld [smem:[#allocation0]]
  $region57: #{tpu_custom_call.1} parent=0
    _
  %s7 = ssub.s32 1, %s5
  %s8 = scalar_select 0, %s7, %s5
  %v9 = vstv %s3
  %10 = vst [vmem:[#allocation2] sm:$0x1] %v9
  $region1: #{tpu_custom_call.1} parent=0
    #allocation3 [shape = 'u8[131072]{0}', space=vmem, size = 0x20000, scoped, tag = 'input window, operand 0']
    #allocation4 [shape = 's32[2]{0}', space=sflag, size = 0x8, scoped, tag = 'scoped memory for tpu_custom_call.1']
    #allocation5 [shape = 's32[2]{0}', space=sflag, size = 0x8, scoped, tag = 'scoped memory for tpu_custom_call.1']
    #allocation6 [shape = 'u8[65536]{0}', space=vmem, size = 0x10000, scoped, tag = 'input window, operand 1, single buffered']
    #allocation7 [shape = 's32[1]{0}', space=sflag, size = 0x4, scoped, tag = 'scoped memory for tpu_custom_call.1']
    #allocation8 [shape = 'u8[32768]{0}', space=vmem, size = 0x8000, scoped, tag = 'output window, operand 0']
    %11 = vsyncpa [#allocation4], 0
    %s12 = scalar_lea.sflag [#allocation4], 1
    %13 = vsyncpa %s12, 0
    %14 = vsyncpa [#allocation7], 0
    %15 = vsyncpa [#allocation5], 0
    %s16 = scalar_lea.sflag [#allocation5], 1
    %17 = vsyncpa %s16, 0
    loop: start=0, step=1, limit=4
    $region2: #{tpu_custom_call.1} parent=1 // loop_pre_header
      _
    $region3: #{tpu_custom_call.1} parent=1 // loop_header
      %s19 = sphi 0, %s23
      %p20 = scmp.ge.s32.totalorder %s19, 4
      %s29 = sphi 0, %s31
      %s32 = sphi 0, %s29
      %s33 = sphi 0, %s32
      %s49 = sphi 0, %s33
      %s53 = sphi 0, %s53
      %s55 = sphi 0, %s53
      %s56 = sphi 0, %s55
      %s70 = sphi 0, %s56
      %s74 = sphi 0, %s74
      %s76 = sphi 0, %s74
      %s77 = sphi 0, %s76
      %s91 = sphi 0, %s77
      %s95 = sphi 0, %s95
      %s97 = sphi 0, %s95
      %s98 = sphi 0, %s97
      %s112 = sphi 0, %s98
      %s118 = sphi 0, %s120
      %s121 = sphi 0, %s118
      %s122 = sphi 0, %s121
      %s138 = sphi 0, %s122
    $region4: #{tpu_custom_call.1} parent=1 // loop_header_branch
      %22 = sbr.rel (%p20) target = $region8
    $region5: #{tpu_custom_call.1} parent=1 // loop_body
      %s24 = ssub.s32 %s19, 1
      %s25 = ssub.s32 %s19, 2
      %s26 = sadd.s32 %s19, 1
      %s27 = ssub.s32 %s19, %s26
      %p28 = scmp.eq.s32.totalorder %s27, 0
      %s30 = sadd.s32 %s29, 1
      %s31 = scalar_select %p28, %s29, %s30
      %p34 = pneg %p28
      %p35 = scmp.eq.s32.totalorder %s19, 1
      %p36 = por %p34, %p35
      %p37 = scmp.ne.s32.totalorder %s29, %s32
      %p38 = scmp.eq.s32.totalorder %s19, 0
      %p39 = por %p37, %p38
      %p40 = scmp.ne.s32.totalorder %s29, %s32
      %p41 = scmp.eq.s32.totalorder %s24, 1
      %p42 = por %p40, %p41
      %p43 = scmp.ne.s32.totalorder %s32, %s33
      %p44 = scmp.eq.s32.totalorder %s24, 0
      %p45 = por %p43, %p44
      %p46 = scmp.ne.s32.totalorder %s32, %s33
      %p47 = scmp.eq.s32.totalorder %s25, 1
      %p48 = por %p46, %p47
      %p50 = scmp.ne.s32.totalorder %s33, %s49
      %p51 = scmp.eq.s32.totalorder %s25, 0
      %p52 = por %p50, %p51
      %s54 = sadd.s32 %s53, 1
      %p57 = scmp.eq.s32.totalorder %s19, 1
      %p58 = scmp.ne.s32.totalorder %s53, %s55
      %p59 = scmp.eq.s32.totalorder %s19, 0
      %p60 = por %p58, %p59
      %p61 = scmp.ne.s32.totalorder %s53, %s55
      %p62 = scmp.eq.s32.totalorder %s24, 1
      %p63 = por %p61, %p62
      %p64 = scmp.ne.s32.totalorder %s55, %s56
      %p65 = scmp.eq.s32.totalorder %s24, 0
      %p66 = por %p64, %p65
      %p67 = scmp.ne.s32.totalorder %s55, %s56
      %p68 = scmp.eq.s32.totalorder %s25, 1
      %p69 = por %p67, %p68
      %p71 = scmp.ne.s32.totalorder %s56, %s70
      %p72 = scmp.eq.s32.totalorder %s25, 0
      %p73 = por %p71, %p72
      %s75 = sadd.s32 %s74, 1
      %p78 = scmp.eq.s32.totalorder %s19, 1
      %p79 = scmp.ne.s32.totalorder %s74, %s76
      %p80 = scmp.eq.s32.totalorder %s19, 0
      %p81 = por %p79, %p80
      %p82 = scmp.ne.s32.totalorder %s74, %s76
      %p83 = scmp.eq.s32.totalorder %s24, 1
      %p84 = por %p82, %p83
      %p85 = scmp.ne.s32.totalorder %s76, %s77
      %p86 = scmp.eq.s32.totalorder %s24, 0
      %p87 = por %p85, %p86
      %p88 = scmp.ne.s32.totalorder %s76, %s77
      %p89 = scmp.eq.s32.totalorder %s25, 1
      %p90 = por %p88, %p89
      %p92 = scmp.ne.s32.totalorder %s77, %s91
      %p93 = scmp.eq.s32.totalorder %s25, 0
      %p94 = por %p92, %p93
      %s96 = sadd.s32 %s95, 1
      %p99 = scmp.eq.s32.totalorder %s19, 1
      %p100 = scmp.ne.s32.totalorder %s95, %s97
      %p101 = scmp.eq.s32.totalorder %s19, 0
      %p102 = por %p100, %p101
      %p103 = scmp.ne.s32.totalorder %s95, %s97
      %p104 = scmp.eq.s32.totalorder %s24, 1
      %p105 = por %p103, %p104
      %p106 = scmp.ne.s32.totalorder %s97, %s98
      %p107 = scmp.eq.s32.totalorder %s24, 0
      %p108 = por %p106, %p107
      %p109 = scmp.ne.s32.totalorder %s97, %s98
      %p110 = scmp.eq.s32.totalorder %s25, 1
      %p111 = por %p109, %p110
      %p113 = scmp.ne.s32.totalorder %s98, %s112
      %p114 = scmp.eq.s32.totalorder %s25, 0
      %p115 = por %p113, %p114
      %s116 = ssub.s32 %s19, %s26
      %p117 = scmp.eq.s32.totalorder %s116, 0
      %s119 = sadd.s32 %s118, 1
      %s120 = scalar_select %p117, %s118, %s119
      %p123 = pneg %p117
      %p124 = scmp.eq.s32.totalorder %s19, 1
      %p125 = por %p123, %p124
      %p126 = scmp.ne.s32.totalorder %s118, %s121
      %p127 = scmp.eq.s32.totalorder %s19, 0
      %p128 = por %p126, %p127
      %p129 = scmp.ne.s32.totalorder %s118, %s121
      %p130 = scmp.eq.s32.totalorder %s24, 1
      %p131 = por %p129, %p130
      %p132 = scmp.ne.s32.totalorder %s121, %s122
      %p133 = scmp.eq.s32.totalorder %s24, 0
      %p134 = por %p132, %p133
      %p135 = scmp.ne.s32.totalorder %s121, %s122
      %p136 = scmp.eq.s32.totalorder %s25, 1
      %p137 = por %p135, %p136
      %p139 = scmp.ne.s32.totalorder %s122, %s138
      %p140 = scmp.eq.s32.totalorder %s25, 0
      %p141 = por %p139, %p140
      %p142 = scmp.le.s32.totalorder 1, %s19
      %p143 = scmp.lt.s32.totalorder %s19, 3
      %p144 = pnand %p142, %p143
      %p145 = pneg %p144
      // Predicated region
      $region9: #{tpu_custom_call.1} parent=5 // pred_check
        _
      $region10: #{tpu_custom_call.1} parent=5 // pred_check_branch
        %147 = sbr.rel (%p144) target = $region12
      $region11: #{tpu_custom_call.1} parent=5 // pred_region
        %s148 = ssub.s32 %s19, 1
        // Predicated region
        $region13: #{tpu_custom_call.1} parent=11 // pred_check
          %p149 = pneg %p66
        $region14: #{tpu_custom_call.1} parent=11 // pred_check_branch
          %151 = sbr.rel (%p149) target = $region16
        $region15: #{tpu_custom_call.1} parent=11 // pred_region
          %s153 = ssub.s32 2048, 2048
          %154 = vsyncadd [#allocation7], %s153
          %s155 = sshll.u32 [#allocation6], 4
          %s156 = int_to_ptr.vmem [resolvable:$true] %s155
          %161 = dma.hbm_to_vmem [thread:$0]  %s1, 2048, %s156, [#allocation7], 128, 128, 8
        $region16: #{tpu_custom_call.1} parent=11 // pred_fallthru
          _
        // Predicated region
        $region17: #{tpu_custom_call.1} parent=11 // pred_check
          %p162 = pneg %p87
        $region18: #{tpu_custom_call.1} parent=11 // pred_check_branch
          %164 = sbr.rel (%p162) target = $region20
        $region19: #{tpu_custom_call.1} parent=11 // pred_region
          _
        $region20: #{tpu_custom_call.1} parent=11 // pred_fallthru
          _
        // Predicated region
        $region21: #{tpu_custom_call.1} parent=11 // pred_check
          %p165 = pneg %p108
        $region22: #{tpu_custom_call.1} parent=11 // pred_check_branch
          %167 = sbr.rel (%p165) target = $region24
        $region23: #{tpu_custom_call.1} parent=11 // pred_region
          _
        $region24: #{tpu_custom_call.1} parent=11 // pred_fallthru
          _
      $region12: #{tpu_custom_call.1} parent=5 // pred_fallthru
        _
      %p168 = scmp.lt.s32.totalorder %s19, 2
      // Predicated region
      $region25: #{tpu_custom_call.1} parent=5 // pred_check
        %p169 = pneg %p168
      $region26: #{tpu_custom_call.1} parent=5 // pred_check_branch
        %171 = sbr.rel (%p169) target = $region28
      $region27: #{tpu_custom_call.1} parent=5 // pred_region
        // Predicated region
        $region29: #{tpu_custom_call.1} parent=27 // pred_check
          %p172 = pneg %p39
        $region30: #{tpu_custom_call.1} parent=27 // pred_check_branch
          %174 = sbr.rel (%p172) target = $region32
        $region31: #{tpu_custom_call.1} parent=27 // pred_region
          #allocation10 [shape = 'u32[6]{0}', space=smem, size = 0x18, scoped, tag = 'DMA stride descriptor']
          %s175 = sand.u32 %s29, 1
          %s176 = scalar_lea.sflag [#allocation4], %s175
          %s177 = sand.u32 %s29, 1
          %s178 = smul.addr %s177, 128
          %s179 = scalar_lea.vmem [#allocation3], %s178
          %s180 = smul.u32 4, %s19
          %s182 = ssub.s32 2048, 2048
          %183 = vsyncadd %s176, %s182
          %s184 = smul.addr %s180, 128
          %s185 = scalar_lea.hbm %s0, %s184
          %s187 = sshll.u32 1, 14
          %s188 = sxor.u32 4294967295, %s187
          %s190 = sld [smem:[#allocation0]]
          %s191 = sadd.s32 2, %s190
          %s193 = sshll.u32 7, 26
          %s194 = sxor.u32 4294967295, %s193
          %s195 = sand.u32 0, %s194
          %s196 = sshll.u32 %s191, 26
          %s197 = sor.u32 %s195, %s196
          %s198 = sshll.u32 %s179, 4
          %s199 = int_to_ptr.vmem [resolvable:$true] %s198
          %205 = sst [smem:[#allocation10]] 1024
          %s206 = scalar_lea.smem [#allocation10], 1
          %207 = sst [smem:[%s206]] 512
          %s208 = scalar_lea.smem [#allocation10], 2
          %209 = sst [smem:[%s208]] 4
          %s210 = scalar_lea.smem [#allocation10], 3
          %211 = sst [smem:[%s210]] 128
          %s212 = scalar_lea.smem [#allocation10], 4
          %213 = sst [smem:[%s212]] 128
          %s214 = scalar_lea.smem [#allocation10], 5
          %215 = sst [smem:[%s214]] 8
          %217 = dma.general %s185, 2048, %s199, %s176, [#allocation9], [#allocation10], %s197, 0
        $region32: #{tpu_custom_call.1} parent=27 // pred_fallthru
          _
      $region28: #{tpu_custom_call.1} parent=5 // pred_fallthru
        _
      %p218 = scmp.le.s32.totalorder 1, %s19
      %p219 = scmp.lt.s32.totalorder %s19, 3
      %p220 = pnand %p218, %p219
      %p221 = pneg %p220
      // Predicated region
      $region33: #{tpu_custom_call.1} parent=5 // pred_check
        _
      $region34: #{tpu_custom_call.1} parent=5 // pred_check_branch
        %223 = sbr.rel (%p220) target = $region36
      $region35: #{tpu_custom_call.1} parent=5 // pred_region
        %s224 = ssub.s32 %s19, 1
        %s225 = sand.u32 %s32, 1
        %s226 = scalar_lea.sflag [#allocation4], %s225
        %s227 = sand.u32 %s32, 1
        %s228 = smul.addr %s227, 128
        %s229 = scalar_lea.vmem [#allocation3], %s228
        // Predicated region
        $region37: #{tpu_custom_call.1} parent=35 // pred_check
          %p230 = pneg %p45
        $region38: #{tpu_custom_call.1} parent=35 // pred_check_branch
          %232 = sbr.rel (%p230) target = $region40
        $region39: #{tpu_custom_call.1} parent=35 // pred_region
          %233 = dma.done %s226, 2048
        $region40: #{tpu_custom_call.1} parent=35 // pred_fallthru
          _
        // Predicated region
        $region41: #{tpu_custom_call.1} parent=35 // pred_check
          %p234 = pneg %p66
        $region42: #{tpu_custom_call.1} parent=35 // pred_check_branch
          %236 = sbr.rel (%p234) target = $region44
        $region43: #{tpu_custom_call.1} parent=35 // pred_region
          %237 = dma.done [#allocation7], 2048
        $region44: #{tpu_custom_call.1} parent=35 // pred_fallthru
          _
        %s238 = sand.u32 %s32, 1
        %s239 = scalar_lea.sflag [#allocation4], %s238
        %s240 = sand.u32 %s32, 1
        %s241 = smul.addr %s240, 128
        %s242 = scalar_lea.vmem [#allocation3], %s241
        %p243 = pneg %p45
        %p244 = pneg %p42
        %p245 = pneg %p66
        %p246 = pneg %p63
        %p247 = pneg %p87
        %p248 = pneg %p84
        %p249 = pneg %p108
        %p250 = pneg %p105
        %p251 = pneg %p134
        %p252 = pneg %p131
        %s253 = sand.u32 %s121, 1
        %s254 = scalar_lea.sflag [#allocation5], %s253
        %s255 = sand.u32 %s121, 1
        %s256 = smul.addr %s255, 32
        %s257 = scalar_lea.vmem [#allocation8], %s256
        %s258 = smul.u32 4, %s24
        %s259 = smul.u32 4, %s24
        %v260 = vld [vmem:[%s229] sm:$0xff]
        %v261 = vld [vmem:[%s229 + $0x8] sm:$0xff]
        %v262 = vld [vmem:[%s229 + $0x10] sm:$0xff]
        %v263 = vld [vmem:[%s229 + $0x18] sm:$0xff]
        %v264 = vld [vmem:[%s229 + $0x20] sm:$0xff]
        %v265 = vld [vmem:[%s229 + $0x28] sm:$0xff]
        %v266 = vld [vmem:[%s229 + $0x30] sm:$0xff]
        %v267 = vld [vmem:[%s229 + $0x38] sm:$0xff]
        %v268 = vld [vmem:[%s229 + $0x40] sm:$0xff]
        %v269 = vld [vmem:[%s229 + $0x48] sm:$0xff]
        %v270 = vld [vmem:[%s229 + $0x50] sm:$0xff]
        %v271 = vld [vmem:[%s229 + $0x58] sm:$0xff]
        %v272 = vld [vmem:[%s229 + $0x60] sm:$0xff]
        %v273 = vld [vmem:[%s229 + $0x68] sm:$0xff]
        %v274 = vld [vmem:[%s229 + $0x70] sm:$0xff]
        %v275 = vld [vmem:[%s229 + $0x78] sm:$0xff]
        %v276 = vld [vmem:[%s2] sm:$0x3]
        %v277 = vld [vmem:[#allocation2] sm:$0x1]
        %v278 = vld [vmem:[#allocation6] sm:$0xff]
        %v279 = vld [vmem:[#allocation6 + $0x8] sm:$0xff]
        %v280 = vld [vmem:[#allocation6 + $0x10] sm:$0xff]
        %v281 = vld [vmem:[#allocation6 + $0x18] sm:$0xff]
        %v282 = vld [vmem:[#allocation6 + $0x20] sm:$0xff]
        %v283 = vld [vmem:[#allocation6 + $0x28] sm:$0xff]
        %v284 = vld [vmem:[#allocation6 + $0x30] sm:$0xff]
        %v285 = vld [vmem:[#allocation6 + $0x38] sm:$0xff]
        %v286 = vld [vmem:[#allocation6 + $0x40] sm:$0xff]
        %v287 = vld [vmem:[#allocation6 + $0x48] sm:$0xff]
        %v288 = vld [vmem:[#allocation6 + $0x50] sm:$0xff]
        %v289 = vld [vmem:[#allocation6 + $0x58] sm:$0xff]
        %v290 = vld [vmem:[#allocation6 + $0x60] sm:$0xff]
        %v291 = vld [vmem:[#allocation6 + $0x68] sm:$0xff]
        %v292 = vld [vmem:[#allocation6 + $0x70] sm:$0xff]
        %v293 = vld [vmem:[#allocation6 + $0x78] sm:$0xff]
        %v294 = vlaneseq
        %v295 = vshrl.u32 %v294, 7
        %v296 = vsub.s32 0, %v295
        %v297 = vrot.slane %v276, %v296
        %298 = vmatprep.subr.mxu0 0.0
        %299 = vmatpush1.msra.mxu0 %v278
        %300 = vmatprep.subr.mxu0 0.0
        %301 = vmatpush1.msra.mxu0 %v279
        %302 = vmatprep.subr.mxu0 0.0
        %303 = vmatpush1.msra.mxu0 %v280
        %304 = vmatprep.subr.mxu0 0.0
        %305 = vmatpush1.msra.mxu0 %v281
        %306 = vmatprep.subr.mxu0 0.0
        %307 = vmatpush1.msra.mxu0 %v282
        %308 = vmatprep.subr.mxu0 0.0
        %309 = vmatpush1.msra.mxu0 %v283
        %310 = vmatprep.subr.mxu0 0.0
        %311 = vmatpush1.msra.mxu0 %v284
        %312 = vmatprep.subr.mxu0 0.0
        %313 = vmatpush1.msra.mxu0 %v285
        %314 = vmatprep.subr.mxu0 0.0
        %315 = vmatpush1.msra.mxu0 %v286
        %316 = vmatprep.subr.mxu0 0.0
        %317 = vmatpush1.msra.mxu0 %v287
        %318 = vmatprep.subr.mxu0 0.0
        %319 = vmatpush1.msra.mxu0 %v288
        %320 = vmatprep.subr.mxu0 0.0
        %321 = vmatpush1.msra.mxu0 %v289
        %322 = vmatprep.subr.mxu0 0.0
        %323 = vmatpush1.msra.mxu0 %v290
        %324 = vmatprep.subr.mxu0 0.0
        %325 = vmatpush1.msra.mxu0 %v291
        %326 = vmatprep.subr.mxu0 0.0
        %327 = vmatpush1.msra.mxu0 %v292
        %328 = vmatprep.subr.mxu0 0.0
        %329 = vmatpush1.msra.mxu0 %v293
        %330 = vmatprep.subr.mxu0 0.0
        %331 = vmatpush1.msra.mxu0 0.0
        %332 = vmatprep.subr.mxu0 0.0
        %333 = vmatpush1.msra.mxu0 0.0
        %334 = vmatprep.subr.mxu0 0.0
        %335 = vmatpush1.msra.mxu0 0.0
        %336 = vmatprep.subr.mxu0 0.0
        %337 = vmatpush1.msra.mxu0 0.0
        %338 = vmatprep.subr.mxu0 0.0
        %339 = vmatpush1.msra.mxu0 0.0
        %340 = vmatprep.subr.mxu0 0.0
        %341 = vmatpush1.msra.mxu0 0.0
        %342 = vmatprep.subr.mxu0 0.0
        %343 = vmatpush1.msra.mxu0 0.0
        %344 = vmatprep.subr.mxu0 0.0
        %345 = vmatpush1.msra.mxu0 0.0
        %346 = vmatprep.subr.mxu0 0.0
        %347 = vmatpush1.msra.mxu0 0.0
        %348 = vmatprep.subr.mxu0 0.0
        %349 = vmatpush1.msra.mxu0 0.0
        %350 = vmatprep.subr.mxu0 0.0
        %351 = vmatpush1.msra.mxu0 0.0
        %352 = vmatprep.subr.mxu0 0.0
        %353 = vmatpush1.msra.mxu0 0.0
        %354 = vmatprep.subr.mxu0 0.0
        %355 = vmatpush1.msra.mxu0 0.0
        %356 = vmatprep.subr.mxu0 0.0
        %357 = vmatpush1.msra.mxu0 0.0
        %358 = vmatprep.subr.mxu0 0.0
        %359 = vmatpush1.msra.mxu0 0.0
        %360 = vmatprep.subr.mxu0 0.0
        %361 = vmatpush1.msra.mxu0 0.0
        %362 = vmatprep.mubr.f32.mxu0 0.0
        %363 = vmatmul.mubr.f32.gmra.mrb[0].mxu0 %v260
        %v364 = vpop.f32.mrb[0].mxu0
        %v365 = vadd.f32 %v297, %v364
        %v366 = vpop.f32.mrb[0].mxu0
        %367 = vmatprep.mubr.f32.mxu0 0.0
        %368 = vmatmul.mubr.f32.gmra.mrb[0].mxu0 %v261
        %v369 = vpop.f32.mrb[0].mxu0
        %v370 = vadd.f32 %v297, %v369
        %v371 = vpop.f32.mrb[0].mxu0
        %372 = vmatprep.mubr.f32.mxu0 0.0
        %373 = vmatmul.mubr.f32.gmra.mrb[0].mxu0 %v262
        %v374 = vpop.f32.mrb[0].mxu0
        %v375 = vadd.f32 %v297, %v374
        %v376 = vpop.f32.mrb[0].mxu0
        %377 = vmatprep.mubr.f32.mxu0 0.0
        %378 = vmatmul.mubr.f32.gmra.mrb[0].mxu0 %v263
        %v379 = vpop.f32.mrb[0].mxu0
        %v380 = vadd.f32 %v297, %v379
        %v381 = vpop.f32.mrb[0].mxu0
        %382 = vmatprep.mubr.f32.mxu0 0.0
        %383 = vmatmul.mubr.f32.gmra.mrb[0].mxu0 %v264
        %v384 = vpop.f32.mrb[0].mxu0
        %v385 = vadd.f32 %v297, %v384
        %v386 = vpop.f32.mrb[0].mxu0
        %387 = vmatprep.mubr.f32.mxu0 0.0
        %388 = vmatmul.mubr.f32.gmra.mrb[0].mxu0 %v265
        %v389 = vpop.f32.mrb[0].mxu0
        %v390 = vadd.f32 %v297, %v389
        %v391 = vpop.f32.mrb[0].mxu0
        %392 = vmatprep.mubr.f32.mxu0 0.0
        %393 = vmatmul.mubr.f32.gmra.mrb[0].mxu0 %v266
        %v394 = vpop.f32.mrb[0].mxu0
        %v395 = vadd.f32 %v297, %v394
        %v396 = vpop.f32.mrb[0].mxu0
        %397 = vmatprep.mubr.f32.mxu0 0.0
        %398 = vmatmul.mubr.f32.gmra.mrb[0].mxu0 %v267
        %v399 = vpop.f32.mrb[0].mxu0
        %v400 = vadd.f32 %v297, %v399
        %v401 = vpop.f32.mrb[0].mxu0
        %402 = vmatprep.mubr.f32.mxu0 0.0
        %403 = vmatmul.mubr.f32.gmra.mrb[0].mxu0 %v268
        %v404 = vpop.f32.mrb[0].mxu0
        %v405 = vadd.f32 %v297, %v404
        %v406 = vpop.f32.mrb[0].mxu0
        %407 = vmatprep.mubr.f32.mxu0 0.0
        %408 = vmatmul.mubr.f32.gmra.mrb[0].mxu0 %v269
        %v409 = vpop.f32.mrb[0].mxu0
        %v410 = vadd.f32 %v297, %v409
        %v411 = vpop.f32.mrb[0].mxu0
        %412 = vmatprep.mubr.f32.mxu0 0.0
        %413 = vmatmul.mubr.f32.gmra.mrb[0].mxu0 %v270
        %v414 = vpop.f32.mrb[0].mxu0
        %v415 = vadd.f32 %v297, %v414
        %v416 = vpop.f32.mrb[0].mxu0
        %417 = vmatprep.mubr.f32.mxu0 0.0
        %418 = vmatmul.mubr.f32.gmra.mrb[0].mxu0 %v271
        %v419 = vpop.f32.mrb[0].mxu0
        %v420 = vadd.f32 %v297, %v419
        %v421 = vpop.f32.mrb[0].mxu0
        %422 = vmatprep.mubr.f32.mxu0 0.0
        %423 = vmatmul.mubr.f32.gmra.mrb[0].mxu0 %v272
        %v424 = vpop.f32.mrb[0].mxu0
        %v425 = vadd.f32 %v297, %v424
        %v426 = vpop.f32.mrb[0].mxu0
        %427 = vmatprep.mubr.f32.mxu0 0.0
        %428 = vmatmul.mubr.f32.gmra.mrb[0].mxu0 %v273
        %v429 = vpop.f32.mrb[0].mxu0
        %v430 = vadd.f32 %v297, %v429
        %v431 = vpop.f32.mrb[0].mxu0
        %432 = vmatprep.mubr.f32.mxu0 0.0
        %433 = vmatmul.mubr.f32.gmra.mrb[0].mxu0 %v274
        %v434 = vpop.f32.mrb[0].mxu0
        %v435 = vadd.f32 %v297, %v434
        %v436 = vpop.f32.mrb[0].mxu0
        %437 = vmatprep.mubr.f32.mxu0 0.0
        %438 = vmatmul.mubr.f32.gmra.mrb[0].mxu0 %v275
        %v439 = vpop.f32.mrb[0].mxu0
        %v440 = vadd.f32 %v297, %v439
        %v441 = vpop.f32.mrb[0].mxu0
        %442 = vdwg.mxu0
        %v443 = vmax.f32 %v365, 0.0
        %v444 = vmax.f32 %v370, 0.0
        %v445 = vmax.f32 %v375, 0.0
        %v446 = vmax.f32 %v380, 0.0
        %v447 = vmax.f32 %v385, 0.0
        %v448 = vmax.f32 %v390, 0.0
        %v449 = vmax.f32 %v395, 0.0
        %v450 = vmax.f32 %v400, 0.0
        %v451 = vmax.f32 %v405, 0.0
        %v452 = vmax.f32 %v410, 0.0
        %v453 = vmax.f32 %v415, 0.0
        %v454 = vmax.f32 %v420, 0.0
        %v455 = vmax.f32 %v425, 0.0
        %v456 = vmax.f32 %v430, 0.0
        %v457 = vmax.f32 %v435, 0.0
        %v458 = vmax.f32 %v440, 0.0
        %v459 = vlaneseq
        %v460 = vshrl.u32 %v459, 7
        %v461 = vsub.s32 1, %v460
        %v462 = vrot.slane %v276, %v461
        %v463 = vmul.f32 %v443, %v462
        %v464 = vmul.f32 %v444, %v462
        %v465 = vmul.f32 %v445, %v462
        %v466 = vmul.f32 %v446, %v462
        %v467 = vmul.f32 %v447, %v462
        %v468 = vmul.f32 %v448, %v462
        %v469 = vmul.f32 %v449, %v462
        %v470 = vmul.f32 %v450, %v462
        %v471 = vmul.f32 %v451, %v462
        %v472 = vmul.f32 %v452, %v462
        %v473 = vmul.f32 %v453, %v462
        %v474 = vmul.f32 %v454, %v462
        %v475 = vmul.f32 %v455, %v462
        %v476 = vmul.f32 %v456, %v462
        %v477 = vmul.f32 %v457, %v462
        %v478 = vmul.f32 %v458, %v462
        %479 = vadd.xlane.f32.xlu0 %v463
        %v480 = vpop.xlane.xlu0 %479
        %481 = vadd.xlane.f32.xlu0 %v464
        %v482 = vpop.xlane.xlu0 %481
        %483 = vadd.xlane.f32.xlu0 %v465
        %v484 = vpop.xlane.xlu0 %483
        %485 = vadd.xlane.f32.xlu0 %v466
        %v486 = vpop.xlane.xlu0 %485
        %487 = vadd.xlane.f32.xlu0 %v467
        %v488 = vpop.xlane.xlu0 %487
        %489 = vadd.xlane.f32.xlu0 %v468
        %v490 = vpop.xlane.xlu0 %489
        %491 = vadd.xlane.f32.xlu0 %v469
        %v492 = vpop.xlane.xlu0 %491
        %493 = vadd.xlane.f32.xlu0 %v470
        %v494 = vpop.xlane.xlu0 %493
        %495 = vadd.xlane.f32.xlu0 %v471
        %v496 = vpop.xlane.xlu0 %495
        %497 = vadd.xlane.f32.xlu0 %v472
        %v498 = vpop.xlane.xlu0 %497
        %499 = vadd.xlane.f32.xlu0 %v473
        %v500 = vpop.xlane.xlu0 %499
        %501 = vadd.xlane.f32.xlu0 %v474
        %v502 = vpop.xlane.xlu0 %501
        %503 = vadd.xlane.f32.xlu0 %v475
        %v504 = vpop.xlane.xlu0 %503
        %505 = vadd.xlane.f32.xlu0 %v476
        %v506 = vpop.xlane.xlu0 %505
        %507 = vadd.xlane.f32.xlu0 %v477
        %v508 = vpop.xlane.xlu0 %507
        %509 = vadd.xlane.f32.xlu0 %v478
        %v510 = vpop.xlane.xlu0 %509
        %v512 = vlaneseq
        %v513 = vshrl.u32 %v512, 7
        %v514 = vsub.s32 0, %v513
        %v515 = vrot.slane %v277, %v514
        %v517 = vadd.f32 %v480, %v515
        %v518 = vadd.f32 %v482, %v515
        %v519 = vadd.f32 %v484, %v515
        %v520 = vadd.f32 %v486, %v515
        %v521 = vadd.f32 %v488, %v515
        %v522 = vadd.f32 %v490, %v515
        %v523 = vadd.f32 %v492, %v515
        %v524 = vadd.f32 %v494, %v515
        %v525 = vadd.f32 %v496, %v515
        %v526 = vadd.f32 %v498, %v515
        %v527 = vadd.f32 %v500, %v515
        %v528 = vadd.f32 %v502, %v515
        %v529 = vadd.f32 %v504, %v515
        %v530 = vadd.f32 %v506, %v515
        %v531 = vadd.f32 %v508, %v515
        %v532 = vadd.f32 %v510, %v515
        %v533 = vmax.f32 %v517, %v521
        %v534 = vmax.f32 %v518, %v522
        %v535 = vmax.f32 %v519, %v523
        %v536 = vmax.f32 %v520, %v524
        %v537 = vmax.f32 %v533, %v525
        %v538 = vmax.f32 %v534, %v526
        %v539 = vmax.f32 %v535, %v527
        %v540 = vmax.f32 %v536, %v528
        %v541 = vmax.f32 %v537, %v529
        %v542 = vmax.f32 %v538, %v530
        %v543 = vmax.f32 %v539, %v531
        %v544 = vmax.f32 %v540, %v532
        %v545 = vsub.f32 %v517, %v541
        %v546 = vsub.f32 %v518, %v542
        %v547 = vsub.f32 %v519, %v543
        %v548 = vsub.f32 %v520, %v544
        %v549 = vmul.f32 %v545, 1.442695
        %v550 = vpow.pop %v549
        %v551 = vmul.f32 %v546, 1.442695
        %v552 = vpow.pop %v551
        %v553 = vmul.f32 %v547, 1.442695
        %v554 = vpow.pop %v553
        %v555 = vmul.f32 %v548, 1.442695
        %v556 = vpow.pop %v555
        %v557 = vsub.f32 %v521, %v541
        %v558 = vsub.f32 %v522, %v542
        %v559 = vsub.f32 %v523, %v543
        %v560 = vsub.f32 %v524, %v544
        %v561 = vmul.f32 %v557, 1.442695
        %v562 = vpow.pop %v561
        %v563 = vmul.f32 %v558, 1.442695
        %v564 = vpow.pop %v563
        %v565 = vmul.f32 %v559, 1.442695
        %v566 = vpow.pop %v565
        %v567 = vmul.f32 %v560, 1.442695
        %v568 = vpow.pop %v567
        %v569 = vsub.f32 %v525, %v541
        %v570 = vsub.f32 %v526, %v542
        %v571 = vsub.f32 %v527, %v543
        %v572 = vsub.f32 %v528, %v544
        %v573 = vmul.f32 %v569, 1.442695
        %v574 = vpow.pop %v573
        %v575 = vmul.f32 %v570, 1.442695
        %v576 = vpow.pop %v575
        %v577 = vmul.f32 %v571, 1.442695
        %v578 = vpow.pop %v577
        %v579 = vmul.f32 %v572, 1.442695
        %v580 = vpow.pop %v579
        %v581 = vsub.f32 %v529, %v541
        %v582 = vsub.f32 %v530, %v542
        %v583 = vsub.f32 %v531, %v543
        %v584 = vsub.f32 %v532, %v544
        %v585 = vmul.f32 %v581, 1.442695
        %v586 = vpow.pop %v585
        %v587 = vmul.f32 %v582, 1.442695
        %v588 = vpow.pop %v587
        %v589 = vmul.f32 %v583, 1.442695
        %v590 = vpow.pop %v589
        %v591 = vmul.f32 %v584, 1.442695
        %v592 = vpow.pop %v591
        %v593 = vadd.f32 %v550, %v562
        %v594 = vadd.f32 %v552, %v564
        %v595 = vadd.f32 %v554, %v566
        %v596 = vadd.f32 %v556, %v568
        %v597 = vadd.f32 %v593, %v574
        %v598 = vadd.f32 %v594, %v576
        %v599 = vadd.f32 %v595, %v578
        %v600 = vadd.f32 %v596, %v580
        %v601 = vadd.f32 %v597, %v586
        %v602 = vadd.f32 %v598, %v588
        %v603 = vadd.f32 %v599, %v590
        %v604 = vadd.f32 %v600, %v592
        %v605 = vrcp.pop %v601
        %v606 = vrcp.pop %v602
        %v607 = vrcp.pop %v603
        %v608 = vrcp.pop %v604
        %610 = vset.pattern.permute.xlu0 0
        %611 = vperm.xlu0 %610, %v550
        %v612 = vpop.permute.xlu0 %611
        %615 = vset.pattern.permute.xlu0 0
        %616 = vperm.xlu0 %615, %v552
        %v617 = vpop.permute.xlu0 %616
        %620 = vset.pattern.permute.xlu0 0
        %621 = vperm.xlu0 %620, %v554
        %v622 = vpop.permute.xlu0 %621
        %625 = vset.pattern.permute.xlu0 0
        %626 = vperm.xlu0 %625, %v556
        %v627 = vpop.permute.xlu0 %626
        %v629 = vmul.f32 %v612, %v260
        %v630 = vmul.f32 %v617, %v261
        %v631 = vmul.f32 %v622, %v262
        %v632 = vmul.f32 %v627, %v263
        %634 = vset.pattern.permute.xlu0 0
        %635 = vperm.xlu0 %634, %v562
        %v636 = vpop.permute.xlu0 %635
        %639 = vset.pattern.permute.xlu0 0
        %640 = vperm.xlu0 %639, %v564
        %v641 = vpop.permute.xlu0 %640
        %644 = vset.pattern.permute.xlu0 0
        %645 = vperm.xlu0 %644, %v566
        %v646 = vpop.permute.xlu0 %645
        %649 = vset.pattern.permute.xlu0 0
        %650 = vperm.xlu0 %649, %v568
        %v651 = vpop.permute.xlu0 %650
        %v653 = vmul.f32 %v636, %v264
        %v654 = vmul.f32 %v641, %v265
        %v655 = vmul.f32 %v646, %v266
        %v656 = vmul.f32 %v651, %v267
        %v657 = vadd.f32 %v629, %v653
        %v658 = vadd.f32 %v630, %v654
        %v659 = vadd.f32 %v631, %v655
        %v660 = vadd.f32 %v632, %v656
        %662 = vset.pattern.permute.xlu0 0
        %663 = vperm.xlu0 %662, %v574
        %v664 = vpop.permute.xlu0 %663
        %667 = vset.pattern.permute.xlu0 0
        %668 = vperm.xlu0 %667, %v576
        %v669 = vpop.permute.xlu0 %668
        %672 = vset.pattern.permute.xlu0 0
        %673 = vperm.xlu0 %672, %v578
        %v674 = vpop.permute.xlu0 %673
        %677 = vset.pattern.permute.xlu0 0
        %678 = vperm.xlu0 %677, %v580
        %v679 = vpop.permute.xlu0 %678
        %v681 = vmul.f32 %v664, %v268
        %v682 = vmul.f32 %v669, %v269
        %v683 = vmul.f32 %v674, %v270
        %v684 = vmul.f32 %v679, %v271
        %v685 = vadd.f32 %v657, %v681
        %v686 = vadd.f32 %v658, %v682
        %v687 = vadd.f32 %v659, %v683
        %v688 = vadd.f32 %v660, %v684
        %690 = vset.pattern.permute.xlu0 0
        %691 = vperm.xlu0 %690, %v586
        %v692 = vpop.permute.xlu0 %691
        %695 = vset.pattern.permute.xlu0 0
        %696 = vperm.xlu0 %695, %v588
        %v697 = vpop.permute.xlu0 %696
        %700 = vset.pattern.permute.xlu0 0
        %701 = vperm.xlu0 %700, %v590
        %v702 = vpop.permute.xlu0 %701
        %705 = vset.pattern.permute.xlu0 0
        %706 = vperm.xlu0 %705, %v592
        %v707 = vpop.permute.xlu0 %706
        %v709 = vmul.f32 %v692, %v272
        %v710 = vmul.f32 %v697, %v273
        %v711 = vmul.f32 %v702, %v274
        %v712 = vmul.f32 %v707, %v275
        %v713 = vadd.f32 %v685, %v709
        %v714 = vadd.f32 %v686, %v710
        %v715 = vadd.f32 %v687, %v711
        %v716 = vadd.f32 %v688, %v712
        %718 = vset.pattern.permute.xlu0 0
        %719 = vperm.xlu0 %718, %v605
        %v720 = vpop.permute.xlu0 %719
        %723 = vset.pattern.permute.xlu0 0
        %724 = vperm.xlu0 %723, %v606
        %v725 = vpop.permute.xlu0 %724
        %728 = vset.pattern.permute.xlu0 0
        %729 = vperm.xlu0 %728, %v607
        %v730 = vpop.permute.xlu0 %729
        %733 = vset.pattern.permute.xlu0 0
        %734 = vperm.xlu0 %733, %v608
        %v735 = vpop.permute.xlu0 %734
        %v737 = vmul.f32 %v713, %v720
        %v738 = vmul.f32 %v714, %v725
        %v739 = vmul.f32 %v715, %v730
        %v740 = vmul.f32 %v716, %v735
        %741 = vst [vmem:[%s257] sm:$0xff] %v737
        %742 = vst [vmem:[%s257 + $0x8] sm:$0xff] %v738
        %743 = vst [vmem:[%s257 + $0x10] sm:$0xff] %v739
        %744 = vst [vmem:[%s257 + $0x18] sm:$0xff] %v740
        %s745 = sand.u32 %s121, 1
        %s746 = scalar_lea.sflag [#allocation5], %s745
        %s747 = sand.u32 %s121, 1
        %s748 = smul.addr %s747, 32
        %s749 = scalar_lea.vmem [#allocation8], %s748
        // Predicated region
        $region45: #{tpu_custom_call.1} parent=35 // pred_check
          %p750 = pneg %p131
        $region46: #{tpu_custom_call.1} parent=35 // pred_check_branch
          %752 = sbr.rel (%p750) target = $region48
        $region47: #{tpu_custom_call.1} parent=35 // pred_region
          %s753 = smul.u32 4, %s24
          %s755 = ssub.s32 512, 512
          %756 = vsyncadd %s746, %s755
          %s757 = smul.addr %s753, 128
          %s758 = scalar_lea.hbm %s4, %s757
          %s759 = sshll.u32 %s749, 4
          %s760 = int_to_ptr.vmem [resolvable:$true] %s759
          %765 = dma.vmem_to_hbm [thread:$0]  %s760, 512, %s758, %s746, 128, 128, 8
        $region48: #{tpu_custom_call.1} parent=35 // pred_fallthru
          _
      $region36: #{tpu_custom_call.1} parent=5 // pred_fallthru
        _
      %p766 = scmp.le.s32.totalorder 2, %s19
      // Predicated region
      $region49: #{tpu_custom_call.1} parent=5 // pred_check
        %p767 = pneg %p766
      $region50: #{tpu_custom_call.1} parent=5 // pred_check_branch
        %769 = sbr.rel (%p767) target = $region52
      $region51: #{tpu_custom_call.1} parent=5 // pred_region
        %s770 = ssub.s32 %s19, 2
        // Predicated region
        $region53: #{tpu_custom_call.1} parent=51 // pred_check
          %p771 = pneg %p137
        $region54: #{tpu_custom_call.1} parent=51 // pred_check_branch
          %773 = sbr.rel (%p771) target = $region56
        $region55: #{tpu_custom_call.1} parent=51 // pred_region
          %s774 = sand.u32 %s122, 1
          %s775 = scalar_lea.sflag [#allocation5], %s774
          %s776 = sand.u32 %s122, 1
          %s777 = smul.addr %s776, 32
          %s778 = scalar_lea.vmem [#allocation8], %s777
          %779 = dma.done %s775, 512
        $region56: #{tpu_custom_call.1} parent=51 // pred_fallthru
          _
      $region52: #{tpu_custom_call.1} parent=5 // pred_fallthru
        _
    $region6: #{tpu_custom_call.1} parent=1 // loop_footer
      %s23 = sadd.s32 1, %s19
    $region7: #{tpu_custom_call.1} parent=1 // loop_footer_branch
      %18 = sbr.rel target = $region3
    $region8: #{tpu_custom_call.1} parent=1 // loop_exit
      _
    %780 = vsyncpa [#allocation4], 1
    %s781 = scalar_lea.sflag [#allocation4], 1
    %782 = vsyncpa %s781, 1
    %783 = vsyncpa [#allocation7], 1
    %784 = vsyncpa [#allocation5], 1
    %s785 = scalar_lea.sflag [#allocation5], 1
    %786 = vsyncpa %s785, 1

</llo_original>
